<compile_context>
chip_gen: v5e
topology: v5e:2x2
jax: 0.10.0
libtpu: 0.0.40
codegen_flags: <defaults>
</compile_context>

<pallas_src>
import functools
import math

import jax
import jax.numpy as jnp
from jax.experimental import pallas as pl
from jax.experimental.pallas import tpu as pltpu


NEG_SLOPE = 0.01  # F.leaky_relu default negative_slope


def _round_up(n, m):
    return (n + m - 1) // m * m


def _leaky_relu(x):
    return jnp.where(x > 0, x, jnp.asarray(NEG_SLOPE, x.dtype) * x)


def _default_elementwise_dtype():
    """bf16 elementwise on chips with a bf16 VPU (v6e/v7x), f32 otherwise."""
    try:
        kind = jax.devices()[0].device_kind.lower()
    except Exception:
        return jnp.float32
    if "v6" in kind or "v7" in kind:
        return jnp.bfloat16
    return jnp.float32


def _bias_act(acc_f32, b_ref, ew_dtype):
    """Bias-add + leaky_relu; returns bf16 ready for the next MXU matmul."""
    if ew_dtype == jnp.bfloat16:
        # bf16 VPU path (v6e/v7x): fold the downcast into the elementwise pass.
        return _leaky_relu(acc_f32.astype(jnp.bfloat16)
                           + b_ref[...].astype(jnp.bfloat16))
    # f32 VPU path (v5e): elementwise in f32, cast once for the next matmul.
    return _leaky_relu(acc_f32 + b_ref[...]).astype(jnp.bfloat16)


def dqn_kernel(x_ref, w1_ref, b1_ref, w2_ref, b2_ref, w3_ref, b3_ref, o_ref,
               *, ew_dtype):
    # Feature-major layout: batch on lanes everywhere.
    # x_ref:  [IN, TB]       bf16
    # w1_ref: [H_pad, IN]    bf16   b1_ref: [H_pad, 1] f32
    # w2_ref: [H_pad, H_pad] bf16   b2_ref: [H_pad, 1] f32
    # w3_ref: [A_pad, H_pad] bf16   b3_ref: [A_pad, 1] f32
    # o_ref:  [A_pad, TB]    f32    (lane-dense store)

    # linear1 + leaky_relu: [H_pad, IN] @ [IN, TB] -> [H_pad, TB]
    h = jnp.dot(w1_ref[...], x_ref[...], preferred_element_type=jnp.float32)
    h = _bias_act(h, b1_ref, ew_dtype)

    # linear2 + leaky_relu: [H_pad, H_pad] @ [H_pad, TB] -> [H_pad, TB]
    h = jnp.dot(w2_ref[...], h, preferred_element_type=jnp.float32)
    h = _bias_act(h, b2_ref, ew_dtype)

    # head: [A_pad, H_pad] @ [H_pad, TB] -> [A_pad, TB]  (no transpose needed)
    q = jnp.dot(w3_ref[...], h, preferred_element_type=jnp.float32)
    o_ref[...] = (q + b3_ref[...]).astype(o_ref.dtype)


def dqn_forward(x, params, *, tb=2048, elementwise_dtype=None):
    """x: [B, input_size] float32; params: dict from init_dqn_params."""
    B, in_size = x.shape
    if elementwise_dtype is None:
        elementwise_dtype = _default_elementwise_dtype()

    num_actions = params["num_actions"]
    h_pad = params["w1t"].shape[0]
    a_pad = params["w3t"].shape[0]

    # Batch tile sits on the lane axis of x, h and the output -> multiple of 128.
    b_al = _round_up(B, 128)
    tb = max(128, _round_up(min(tb, b_al), 128))
    # Guarantee >= 2 grid steps when the batch is big enough so the "parallel"
    # grid axis can shard across both TensorCores on v7x.  For smaller batches
    # a single large step minimizes per-step overhead.
    if b_al >= 2 * 128:
        tb = min(tb, _round_up(b_al // 2, 128))
    b_pad = _round_up(b_al, tb)

    # Feature-major (lane-dense) input: [IN, B_pad] bf16.
    xt = x.T.astype(jnp.bfloat16)
    if b_pad != B:
        xt = jnp.pad(xt, ((0, 0), (0, b_pad - B)))

    grid = (b_pad // tb,)

    flops = 2 * b_pad * (in_size * h_pad + h_pad * h_pad + h_pad * a_pad)
    bytes_accessed = (
        in_size * b_pad * 2                                   # x (bf16)
        + a_pad * b_pad * 4                                   # out (f32)
        + (in_size * h_pad + h_pad * h_pad + a_pad * h_pad) * 2  # weights bf16
        + (2 * h_pad + a_pad) * 4)                            # biases f32

    kernel = functools.partial(dqn_kernel, ew_dtype=elementwise_dtype)

    out_t = pl.pallas_call(
        kernel,
        out_shape=jax.ShapeDtypeStruct((a_pad, b_pad), jnp.float32),
        grid_spec=pltpu.PrefetchScalarGridSpec(
            num_scalar_prefetch=0,
            grid=grid,
            in_specs=[
                # x: pipelined over the batch grid (lane-dense tile)
                pl.BlockSpec((in_size, tb), lambda i: (0, i)),
                # weights / biases: constant index_map -> VMEM-resident
                pl.BlockSpec((h_pad, in_size), lambda i: (0, 0)),
                pl.BlockSpec((h_pad, 1), lambda i: (0, 0)),
                pl.BlockSpec((h_pad, h_pad), lambda i: (0, 0)),
                pl.BlockSpec((h_pad, 1), lambda i: (0, 0)),
                pl.BlockSpec((a_pad, h_pad), lambda i: (0, 0)),
                pl.BlockSpec((a_pad, 1), lambda i: (0, 0)),
            ],
            out_specs=pl.BlockSpec((a_pad, tb), lambda i: (0, i)),
        ),
        compiler_params=pltpu.CompilerParams(
            dimension_semantics=("parallel",)),
        cost_estimate=pl.CostEstimate(
            flops=flops, transcendentals=0, bytes_accessed=bytes_accessed),
    )(xt, params["w1t"], params["b1"], params["w2t"], params["b2"],
      params["w3t"], params["b3t"])

    # Cheap wrapper-side unpad + transpose of a tiny [A_pad, B_pad] slab.
    return out_t[:num_actions, :B].T


def init_dqn_params(key, input_size, num_actions, hidden=50):
    """nn.Linear-style init, stored feature-major (transposed) and zero-padded
    to TPU-friendly shapes; MXU operands cast to bf16.  Zero padding is inert
    (leaky_relu(0) == 0, padded rows/cols contribute nothing)."""
    hidden_pad = _round_up(hidden, 64)                # 50 -> 64
    actions_pad = _round_up(max(num_actions, 1), 8)   # 4 -> 8

    def linear(k, fan_in, fan_out):
        kw, kb = jax.random.split(k)
        bound = 1.0 / math.sqrt(float(fan_in))
        w = jax.random.uniform(kw, (fan_in, fan_out), jnp.float32, -bound, bound)
        b = jax.random.uniform(kb, (fan_out,), jnp.float32, -bound, bound)
        return w, b

    k1, k2, k3 = jax.random.split(key, 3)
    w1, b1 = linear(k1, input_size, hidden)
    w2, b2 = linear(k2, hidden, hidden)
    w3, b3 = linear(k3, hidden, num_actions)

    # Stored transposed: layer l maps [fan_out, fan_in] so the kernel does W @ X.
    w1t = jnp.zeros((hidden_pad, input_size), jnp.float32).at[:hidden, :].set(w1.T)
    b1p = jnp.zeros((hidden_pad, 1), jnp.float32).at[:hidden, 0].set(b1)
    w2t = jnp.zeros((hidden_pad, hidden_pad), jnp.float32).at[:hidden, :hidden].set(w2.T)
    b2p = jnp.zeros((hidden_pad, 1), jnp.float32).at[:hidden, 0].set(b2)
    w3t = jnp.zeros((actions_pad, hidden_pad), jnp.float32).at[:num_actions, :hidden].set(w3.T)
    b3p = jnp.zeros((actions_pad, 1), jnp.float32).at[:num_actions, 0].set(b3)

    return {
        "w1t": w1t.astype(jnp.bfloat16), "b1": b1p,
        "w2t": w2t.astype(jnp.bfloat16), "b2": b2p,
        "w3t": w3t.astype(jnp.bfloat16), "b3t": b3p,
        "num_actions": num_actions,
    }


def dqn_ref(x, p, elementwise_dtype):
    """Pure-JAX reference mirroring the kernel's feature-major layout, bf16
    matmuls and elementwise-dtype choice exactly."""
    def act(acc_f32, b):
        if elementwise_dtype == jnp.bfloat16:
            return _leaky_relu(acc_f32.astype(jnp.bfloat16) + b.astype(jnp.bfloat16))
        return _leaky_relu(acc_f32 + b).astype(jnp.bfloat16)

    xt = x.T.astype(jnp.bfloat16)                                     # [IN, B]
    h = act(jnp.dot(p["w1t"], xt, preferred_element_type=jnp.float32), p["b1"])
    h = act(jnp.dot(p["w2t"], h, preferred_element_type=jnp.float32), p["b2"])
    q = jnp.dot(p["w3t"], h, preferred_element_type=jnp.float32) + p["b3t"]
    return q[:p["num_actions"], :].T


if __name__ == "__main__":
    key = jax.random.PRNGKey(0)
    k_params, k_x = jax.random.split(key)

    batch = 64
    input_size = 16
    num_actions = 4

    params = init_dqn_params(k_params, input_size, num_actions)
    x = jax.random.normal(k_x, (batch, input_size), jnp.float32)

    ew = _default_elementwise_dtype()
    out = jax.block_until_ready(dqn_forward(x, params, elementwise_dtype=ew))
    ref = dqn_ref(x, params, ew)

    assert out.shape == (batch, num_actions)
    assert jnp.allclose(out, ref, atol=1e-3, rtol=1e-3), float(
        jnp.max(jnp.abs(out - ref)))

    print("KERNEL_OK")
</pallas_src>

<mosaic_0001>
module attributes {stable_mosaic.version = 11 : i64} {
  func.func @dqn_kernel(%arg0: i32, %arg1: memref<16x128xbf16, #tpu.memory_space<vmem>>, %arg2: memref<64x16xbf16, #tpu.memory_space<vmem>>, %arg3: memref<64x1xf32, #tpu.memory_space<vmem>>, %arg4: memref<64x64xbf16, #tpu.memory_space<vmem>>, %arg5: memref<64x1xf32, #tpu.memory_space<vmem>>, %arg6: memref<8x64xbf16, #tpu.memory_space<vmem>>, %arg7: memref<8x1xf32, #tpu.memory_space<vmem>>, %arg8: memref<8x128xf32, #tpu.memory_space<vmem>>) attributes {dimension_semantics = [#tpu.dimension_semantics<parallel>], iteration_bounds = array<i64: 1>, scalar_prefetch = 0 : i64, scratch_operands = 0 : i64, tpu.core_type = #tpu.core_type<tc>, window_params = [{transform_indices = @transform_0, window_bounds = array<i64: 16, 128>}, {pipeline_mode = #tpu.pipeline_mode<synchronous>, transform_indices = @transform_1, window_bounds = array<i64: 64, 16>}, {pipeline_mode = #tpu.pipeline_mode<synchronous>, transform_indices = @transform_2, window_bounds = array<i64: 64, 1>}, {pipeline_mode = #tpu.pipeline_mode<synchronous>, transform_indices = @transform_3, window_bounds = array<i64: 64, 64>}, {pipeline_mode = #tpu.pipeline_mode<synchronous>, transform_indices = @transform_4, window_bounds = array<i64: 64, 1>}, {pipeline_mode = #tpu.pipeline_mode<synchronous>, transform_indices = @transform_5, window_bounds = array<i64: 8, 64>}, {pipeline_mode = #tpu.pipeline_mode<synchronous>, transform_indices = @transform_6, window_bounds = array<i64: 8, 1>}, {transform_indices = @transform_7, window_bounds = array<i64: 8, 128>}]} {
    %c0 = arith.constant 0 : index
    %c0_0 = arith.constant 0 : index
    %0 = vector.load %arg2[%c0, %c0_0] : memref<64x16xbf16, #tpu.memory_space<vmem>>, vector<64x16xbf16>
    %c0_1 = arith.constant 0 : index
    %c0_2 = arith.constant 0 : index
    %1 = vector.load %arg1[%c0_1, %c0_2] : memref<16x128xbf16, #tpu.memory_space<vmem>>, vector<16x128xbf16>
    %cst = arith.constant dense<0.000000e+00> : vector<64x128xf32>
    %2 = tpu.matmul %0, %1, %cst {dimension_numbers = #tpu.dot_dimension_numbers<[1], [0], [0], [1], [0, 0, 1, 1], [], []>} : vector<64x16xbf16>, vector<16x128xbf16>, vector<64x128xf32> -> vector<64x128xf32>
    %c0_3 = arith.constant 0 : index
    %c0_4 = arith.constant 0 : index
    %3 = vector.load %arg3[%c0_3, %c0_4] : memref<64x1xf32, #tpu.memory_space<vmem>>, vector<64x1xf32>
    %4 = vector.broadcast %3 : vector<64x1xf32> to vector<64x128xf32>
    %5 = arith.addf %2, %4 : vector<64x128xf32>
    %cst_5 = arith.constant 0.000000e+00 : f32
    %6 = vector.broadcast %cst_5 : f32 to vector<64x128xf32>
    %7 = arith.cmpf ogt, %5, %6 : vector<64x128xf32>
    %cst_6 = arith.constant 0.00999999977 : f32
    %8 = vector.broadcast %cst_6 : f32 to vector<64x128xf32>
    %9 = arith.mulf %8, %5 : vector<64x128xf32>
    %10 = arith.select %7, %5, %9 : vector<64x128xi1>, vector<64x128xf32>
    %11 = arith.truncf %10 : vector<64x128xf32> to vector<64x128xbf16>
    %c0_7 = arith.constant 0 : index
    %c0_8 = arith.constant 0 : index
    %12 = vector.load %arg4[%c0_7, %c0_8] : memref<64x64xbf16, #tpu.memory_space<vmem>>, vector<64x64xbf16>
    %cst_9 = arith.constant dense<0.000000e+00> : vector<64x128xf32>
    %13 = tpu.matmul %12, %11, %cst_9 {dimension_numbers = #tpu.dot_dimension_numbers<[1], [0], [0], [1], [0, 0, 1, 1], [], []>} : vector<64x64xbf16>, vector<64x128xbf16>, vector<64x128xf32> -> vector<64x128xf32>
    %c0_10 = arith.constant 0 : index
    %c0_11 = arith.constant 0 : index
    %14 = vector.load %arg5[%c0_10, %c0_11] : memref<64x1xf32, #tpu.memory_space<vmem>>, vector<64x1xf32>
    %15 = vector.broadcast %14 : vector<64x1xf32> to vector<64x128xf32>
    %16 = arith.addf %13, %15 : vector<64x128xf32>
    %cst_12 = arith.constant 0.000000e+00 : f32
    %17 = vector.broadcast %cst_12 : f32 to vector<64x128xf32>
    %18 = arith.cmpf ogt, %16, %17 : vector<64x128xf32>
    %cst_13 = arith.constant 0.00999999977 : f32
    %19 = vector.broadcast %cst_13 : f32 to vector<64x128xf32>
    %20 = arith.mulf %19, %16 : vector<64x128xf32>
    %21 = arith.select %18, %16, %20 : vector<64x128xi1>, vector<64x128xf32>
    %22 = arith.truncf %21 : vector<64x128xf32> to vector<64x128xbf16>
    %c0_14 = arith.constant 0 : index
    %c0_15 = arith.constant 0 : index
    %23 = vector.load %arg6[%c0_14, %c0_15] : memref<8x64xbf16, #tpu.memory_space<vmem>>, vector<8x64xbf16>
    %cst_16 = arith.constant dense<0.000000e+00> : vector<8x128xf32>
    %24 = tpu.matmul %23, %22, %cst_16 {dimension_numbers = #tpu.dot_dimension_numbers<[1], [0], [0], [1], [0, 0, 1, 1], [], []>} : vector<8x64xbf16>, vector<64x128xbf16>, vector<8x128xf32> -> vector<8x128xf32>
    %c0_17 = arith.constant 0 : index
    %c0_18 = arith.constant 0 : index
    %25 = vector.load %arg7[%c0_17, %c0_18] : memref<8x1xf32, #tpu.memory_space<vmem>>, vector<8x1xf32>
    %26 = vector.broadcast %25 : vector<8x1xf32> to vector<8x128xf32>
    %27 = arith.addf %24, %26 : vector<8x128xf32>
    %c0_19 = arith.constant 0 : index
    %c0_20 = arith.constant 0 : index
    %28 = vector.load %arg8[%c0_19, %c0_20] : memref<8x128xf32, #tpu.memory_space<vmem>>, vector<8x128xf32>
    tpu.vector_store %arg8[%c0_19, %c0_20], %27 {strides = array<i32>} : memref<8x128xf32, #tpu.memory_space<vmem>>, vector<8x128xf32>,
    return
  }
  func.func @transform_0(%arg0: i32) -> (i32, i32) {
    %c0_i32 = arith.constant 0 : i32
    %c0_i32_0 = arith.constant 0 : i32
    return %c0_i32, %arg0 : i32, i32
  }
  func.func @transform_1(%arg0: i32) -> (i32, i32) {
    %c0_i32 = arith.constant 0 : i32
    %c0_i32_0 = arith.constant 0 : i32
    %c0_i32_1 = arith.constant 0 : i32
    return %c0_i32, %c0_i32_0 : i32, i32
  }
  func.func @transform_2(%arg0: i32) -> (i32, i32) {
    %c0_i32 = arith.constant 0 : i32
    %c0_i32_0 = arith.constant 0 : i32
    %c0_i32_1 = arith.constant 0 : i32
    return %c0_i32, %c0_i32_0 : i32, i32
  }
  func.func @transform_3(%arg0: i32) -> (i32, i32) {
    %c0_i32 = arith.constant 0 : i32
    %c0_i32_0 = arith.constant 0 : i32
    %c0_i32_1 = arith.constant 0 : i32
    return %c0_i32, %c0_i32_0 : i32, i32
  }
  func.func @transform_4(%arg0: i32) -> (i32, i32) {
    %c0_i32 = arith.constant 0 : i32
    %c0_i32_0 = arith.constant 0 : i32
    %c0_i32_1 = arith.constant 0 : i32
    return %c0_i32, %c0_i32_0 : i32, i32
  }
  func.func @transform_5(%arg0: i32) -> (i32, i32) {
    %c0_i32 = arith.constant 0 : i32
    %c0_i32_0 = arith.constant 0 : i32
    %c0_i32_1 = arith.constant 0 : i32
    return %c0_i32, %c0_i32_0 : i32, i32
  }
  func.func @transform_6(%arg0: i32) -> (i32, i32) {
    %c0_i32 = arith.constant 0 : i32
    %c0_i32_0 = arith.constant 0 : i32
    %c0_i32_1 = arith.constant 0 : i32
    return %c0_i32, %c0_i32_0 : i32, i32
  }
  func.func @transform_7(%arg0: i32) -> (i32, i32) {
    %c0_i32 = arith.constant 0 : i32
    %c0_i32_0 = arith.constant 0 : i32
    return %c0_i32, %arg0 : i32, i32
  }
}

</mosaic_0001>

<llo_original>
// kernel: tpu_custom_call.1
$region0: #{tpu_custom_call.1}
  #allocation0 [shape = 'u32[]', space=smem, size = 0x4, offset = 0x4, fixed_abs, tag = 'smem constant byte address 0x4 - core index']
  #allocation1 [shape = 'u32[72,128]{1,0:T(1,128)}', space=vmem, size = 0x9000, scoped, tag = 'internal scratch']
  %s0 = inlined_call_operand.vmem [shape: bf16[16,128], index: 0, kind: input, shape index: {}]
  %s1 = inlined_call_operand.vmem [shape: bf16[64,16], index: 1, kind: input, shape index: {}]
  %s2 = inlined_call_operand.vmem [shape: f32[64,1], index: 2, kind: input, shape index: {}]
  %s3 = inlined_call_operand.vmem [shape: bf16[64,64], index: 3, kind: input, shape index: {}]
  %s4 = inlined_call_operand.vmem [shape: f32[64,1], index: 4, kind: input, shape index: {}]
  %s5 = inlined_call_operand.vmem [shape: bf16[8,64], index: 5, kind: input, shape index: {}]
  %s6 = inlined_call_operand.vmem [shape: f32[8,1], index: 6, kind: input, shape index: {}]
  %s7 = inlined_call_operand.hbm [shape: f32[8,128], index: 7, kind: output, shape index: {}]
  %s8 = sld [smem:[#allocation0]]
  $region38: #{tpu_custom_call.1} parent=0
    _
  %s10 = ssub.s32 1, %s8
  %s11 = scalar_select 0, %s10, %s8
  $region1: #{tpu_custom_call.1} parent=0
    #allocation2 [shape = 'u8[4096]{0}', space=vmem, size = 0x1000, scoped, tag = 'output window, operand 0, single buffered']
    #allocation3 [shape = 's32[1]{0}', space=sflag, size = 0x4, scoped, tag = 'scoped memory for tpu_custom_call.1']
    %12 = vsyncpa [#allocation3], 0
    // Predicated region
    $region2: #{tpu_custom_call.1} parent=1 // pred_check
      _
    $region3: #{tpu_custom_call.1} parent=1 // pred_check_branch
      %14 = sbr.rel (0) target = $region5
    $region4: #{tpu_custom_call.1} parent=1 // pred_region
      _
    $region5: #{tpu_custom_call.1} parent=1 // pred_fallthru
      _
    // Predicated region
    $region6: #{tpu_custom_call.1} parent=1 // pred_check
      _
    $region7: #{tpu_custom_call.1} parent=1 // pred_check_branch
      %16 = sbr.rel (0) target = $region9
    $region8: #{tpu_custom_call.1} parent=1 // pred_region
      _
    $region9: #{tpu_custom_call.1} parent=1 // pred_fallthru
      _
    // Predicated region
    $region10: #{tpu_custom_call.1} parent=1 // pred_check
      _
    $region11: #{tpu_custom_call.1} parent=1 // pred_check_branch
      %18 = sbr.rel (0) target = $region13
    $region12: #{tpu_custom_call.1} parent=1 // pred_region
      _
    $region13: #{tpu_custom_call.1} parent=1 // pred_fallthru
      _
    // Predicated region
    $region14: #{tpu_custom_call.1} parent=1 // pred_check
      _
    $region15: #{tpu_custom_call.1} parent=1 // pred_check_branch
      %20 = sbr.rel (0) target = $region17
    $region16: #{tpu_custom_call.1} parent=1 // pred_region
      _
    $region17: #{tpu_custom_call.1} parent=1 // pred_fallthru
      _
    // Predicated region
    $region18: #{tpu_custom_call.1} parent=1 // pred_check
      _
    $region19: #{tpu_custom_call.1} parent=1 // pred_check_branch
      %22 = sbr.rel (0) target = $region21
    $region20: #{tpu_custom_call.1} parent=1 // pred_region
      _
    $region21: #{tpu_custom_call.1} parent=1 // pred_fallthru
      _
    // Predicated region
    $region22: #{tpu_custom_call.1} parent=1 // pred_check
      _
    $region23: #{tpu_custom_call.1} parent=1 // pred_check_branch
      %24 = sbr.rel (0) target = $region25
    $region24: #{tpu_custom_call.1} parent=1 // pred_region
      _
    $region25: #{tpu_custom_call.1} parent=1 // pred_fallthru
      _
    // Predicated region
    $region26: #{tpu_custom_call.1} parent=1 // pred_check
      _
    $region27: #{tpu_custom_call.1} parent=1 // pred_check_branch
      %26 = sbr.rel (0) target = $region29
    $region28: #{tpu_custom_call.1} parent=1 // pred_region
      _
    $region29: #{tpu_custom_call.1} parent=1 // pred_fallthru
      _
    %v28 = vld [vmem:[%s1] sm:$0xf]
    %v29 = vld [vmem:[%s1 + $0x4] sm:$0xf]
    %v30 = vld [vmem:[%s1 + $0x8] sm:$0xf]
    %v31 = vld [vmem:[%s1 + $0xc] sm:$0xf]
    %v32 = vld [vmem:[%s1 + $0x10] sm:$0xf]
    %v33 = vld [vmem:[%s1 + $0x14] sm:$0xf]
    %v34 = vld [vmem:[%s1 + $0x18] sm:$0xf]
    %v35 = vld [vmem:[%s1 + $0x1c] sm:$0xf]
    %v36 = vld [vmem:[%s0] sm:$0xf]
    %v37 = vld [vmem:[%s0 + $0x4] sm:$0xf]
    %v38 = vld [vmem:[%s2] sm:$0xff]
    %v39 = vld [vmem:[%s2 + $0x8] sm:$0xff]
    %v40 = vld [vmem:[%s2 + $0x10] sm:$0xff]
    %v41 = vld [vmem:[%s2 + $0x18] sm:$0xff]
    %v42 = vld [vmem:[%s2 + $0x20] sm:$0xff]
    %v43 = vld [vmem:[%s2 + $0x28] sm:$0xff]
    %v44 = vld [vmem:[%s2 + $0x30] sm:$0xff]
    %v45 = vld [vmem:[%s2 + $0x38] sm:$0xff]
    %47 = vset.pattern.permute.xlu0 0
    %48 = vperm.xlu0 %47, %v38
    %v49 = vpop.permute.xlu0 %48
    %52 = vset.pattern.permute.xlu0 0
    %53 = vperm.xlu0 %52, %v39
    %v54 = vpop.permute.xlu0 %53
    %57 = vset.pattern.permute.xlu0 0
    %58 = vperm.xlu0 %57, %v40
    %v59 = vpop.permute.xlu0 %58
    %62 = vset.pattern.permute.xlu0 0
    %63 = vperm.xlu0 %62, %v41
    %v64 = vpop.permute.xlu0 %63
    %67 = vset.pattern.permute.xlu0 0
    %68 = vperm.xlu0 %67, %v42
    %v69 = vpop.permute.xlu0 %68
    %72 = vset.pattern.permute.xlu0 0
    %73 = vperm.xlu0 %72, %v43
    %v74 = vpop.permute.xlu0 %73
    %77 = vset.pattern.permute.xlu0 0
    %78 = vperm.xlu0 %77, %v44
    %v79 = vpop.permute.xlu0 %78
    %82 = vset.pattern.permute.xlu0 0
    %83 = vperm.xlu0 %82, %v45
    %v84 = vpop.permute.xlu0 %83
    %v94 = vunpack.c.l.b16 %v28
    %v95 = vunpack.c.l.b16 %v29
    %v96 = vunpack.c.l.b16 %v30
    %v97 = vunpack.c.l.b16 %v31
    %v98 = vunpack.c.l.b16 %v32
    %v99 = vunpack.c.l.b16 %v33
    %v100 = vunpack.c.l.b16 %v34
    %v101 = vunpack.c.l.b16 %v35
    %v102 = vpack.c.b16 %v95, %v94
    %v103 = vpack.c.b16 %v97, %v96
    %v104 = vpack.c.b16 %v99, %v98
    %v105 = vpack.c.b16 %v101, %v100
    %v108 = vunpack.c.l.b16 %v36
    %v109 = vunpack.c.l.b16 %v37
    %v110 = vpack.c.b16 %v109, %v108
    %vm112 = vcmask 130048
    %v114 = vsel %vm112, %v102, 0
    %v117 = vsel %vm112, %v103, 0
    %v120 = vsel %vm112, %v104, 0
    %v123 = vsel %vm112, %v105, 0
    %125 = vmatpush.bf16.msra.mxu0 0
    %126 = vmatpush.bf16.msra.mxu0 0
    %127 = vmatpush.bf16.msra.mxu0 0
    %128 = vmatpush.bf16.msra.mxu0 0
    %129 = vmatpush.bf16.msra.mxu0 0
    %130 = vmatpush.bf16.msra.mxu0 0
    %131 = vmatpush.bf16.msra.mxu0 0
    %132 = vmatpush.bf16.msra.mxu0 %v110
    %133 = vmatmul.bf16.gmra.mxu0 %v114
    %v134 = vpop.f32.mrf.mxu0
    %v135 = vadd.f32 %v49, %v134
    %v136 = vpop.f32.mrf.mxu0
    %v137 = vadd.f32 %v54, %v136
    %138 = vmatmul.bf16.gmra.mxu0 %v117
    %v139 = vpop.f32.mrf.mxu0
    %v140 = vadd.f32 %v59, %v139
    %v141 = vpop.f32.mrf.mxu0
    %v142 = vadd.f32 %v64, %v141
    %143 = vmatmul.bf16.gmra.mxu0 %v120
    %v144 = vpop.f32.mrf.mxu0
    %v145 = vadd.f32 %v69, %v144
    %v146 = vpop.f32.mrf.mxu0
    %v147 = vadd.f32 %v74, %v146
    %148 = vmatmul.bf16.gmra.mxu0 %v123
    %v149 = vpop.f32.mrf.mxu0
    %v150 = vadd.f32 %v79, %v149
    %v151 = vpop.f32.mrf.mxu0
    %v152 = vadd.f32 %v84, %v151
    %153 = vdwg.mxu0
    %vm154 = vcmp.gt.f32.partialorder %v135, 0.0
    %vm155 = vcmp.gt.f32.partialorder %v137, 0.0
    %vm156 = vcmp.gt.f32.partialorder %v140, 0.0
    %vm157 = vcmp.gt.f32.partialorder %v142, 0.0
    %vm158 = vcmp.gt.f32.partialorder %v145, 0.0
    %vm159 = vcmp.gt.f32.partialorder %v147, 0.0
    %vm160 = vcmp.gt.f32.partialorder %v150, 0.0
    %vm161 = vcmp.gt.f32.partialorder %v152, 0.0
    %v162 = vmul.f32 %v135, 0.01
    %v163 = vmul.f32 %v137, 0.01
    %v164 = vmul.f32 %v140, 0.01
    %v165 = vmul.f32 %v142, 0.01
    %v166 = vmul.f32 %v145, 0.01
    %v167 = vmul.f32 %v147, 0.01
    %v168 = vmul.f32 %v150, 0.01
    %v169 = vmul.f32 %v152, 0.01
    %v170 = vsel %vm154, %v135, %v162
    %v171 = vsel %vm155, %v137, %v163
    %v172 = vsel %vm156, %v140, %v164
    %v173 = vsel %vm157, %v142, %v165
    %v174 = vsel %vm158, %v145, %v166
    %v175 = vsel %vm159, %v147, %v167
    %v176 = vsel %vm160, %v150, %v168
    %v177 = vsel %vm161, %v152, %v169
    %v178 = vpack.c.bf16 %v171, %v170
    %v179 = vpack.c.bf16 %v173, %v172
    %v180 = vpack.c.bf16 %v175, %v174
    %v181 = vpack.c.bf16 %v177, %v176
    %v182 = vld [vmem:[%s3] sm:$0xf]
    %v183 = vld [vmem:[%s3 + $0x4] sm:$0xf]
    %v184 = vld [vmem:[%s3 + $0x8] sm:$0xf]
    %v185 = vld [vmem:[%s3 + $0xc] sm:$0xf]
    %v186 = vld [vmem:[%s3 + $0x10] sm:$0xf]
    %v187 = vld [vmem:[%s3 + $0x14] sm:$0xf]
    %v188 = vld [vmem:[%s3 + $0x18] sm:$0xf]
    %v189 = vld [vmem:[%s3 + $0x1c] sm:$0xf]
    %v190 = vld [vmem:[%s4] sm:$0xff]
    %v191 = vld [vmem:[%s4 + $0x8] sm:$0xff]
    %v192 = vld [vmem:[%s4 + $0x10] sm:$0xff]
    %v193 = vld [vmem:[%s4 + $0x18] sm:$0xff]
    %v194 = vld [vmem:[%s4 + $0x20] sm:$0xff]
    %v195 = vld [vmem:[%s4 + $0x28] sm:$0xff]
    %v196 = vld [vmem:[%s4 + $0x30] sm:$0xff]
    %v197 = vld [vmem:[%s4 + $0x38] sm:$0xff]
    %199 = vset.pattern.permute.xlu0 0
    %200 = vperm.xlu0 %199, %v190
    %v201 = vpop.permute.xlu0 %200
    %204 = vset.pattern.permute.xlu0 0
    %205 = vperm.xlu0 %204, %v191
    %v206 = vpop.permute.xlu0 %205
    %209 = vset.pattern.permute.xlu0 0
    %210 = vperm.xlu0 %209, %v192
    %v211 = vpop.permute.xlu0 %210
    %214 = vset.pattern.permute.xlu0 0
    %215 = vperm.xlu0 %214, %v193
    %v216 = vpop.permute.xlu0 %215
    %219 = vset.pattern.permute.xlu0 0
    %220 = vperm.xlu0 %219, %v194
    %v221 = vpop.permute.xlu0 %220
    %224 = vset.pattern.permute.xlu0 0
    %225 = vperm.xlu0 %224, %v195
    %v226 = vpop.permute.xlu0 %225
    %229 = vset.pattern.permute.xlu0 0
    %230 = vperm.xlu0 %229, %v196
    %v231 = vpop.permute.xlu0 %230
    %234 = vset.pattern.permute.xlu0 0
    %235 = vperm.xlu0 %234, %v197
    %v236 = vpop.permute.xlu0 %235
    %v246 = vunpack.c.l.b16 %v182
    %v247 = vunpack.c.l.b16 %v183
    %v248 = vunpack.c.l.b16 %v184
    %v249 = vunpack.c.l.b16 %v185
    %v250 = vunpack.c.l.b16 %v186
    %v251 = vunpack.c.l.b16 %v187
    %v252 = vunpack.c.l.b16 %v188
    %v253 = vunpack.c.l.b16 %v189
    %v254 = vpack.c.b16 %v247, %v246
    %v255 = vpack.c.b16 %v249, %v248
    %v256 = vpack.c.b16 %v251, %v250
    %v257 = vpack.c.b16 %v253, %v252
    %vm258 = vcmask 523264
    %v260 = vsel %vm258, %v254, 0
    %v263 = vsel %vm258, %v255, 0
    %v266 = vsel %vm258, %v256, 0
    %v269 = vsel %vm258, %v257, 0
    %271 = vmatpush.bf16.msra.mxu0 0
    %272 = vmatpush.bf16.msra.mxu0 0
    %273 = vmatpush.bf16.msra.mxu0 0
    %274 = vmatpush.bf16.msra.mxu0 0
    %275 = vmatpush.bf16.msra.mxu0 %v181
    %276 = vmatpush.bf16.msra.mxu0 %v180
    %277 = vmatpush.bf16.msra.mxu0 %v179
    %278 = vmatpush.bf16.msra.mxu0 %v178
    %279 = vmatmul.bf16.gmra.mxu0 %v260
    %v280 = vpop.f32.mrf.mxu0
    %v281 = vadd.f32 %v201, %v280
    %v282 = vpop.f32.mrf.mxu0
    %v283 = vadd.f32 %v206, %v282
    %284 = vmatmul.bf16.gmra.mxu0 %v263
    %v285 = vpop.f32.mrf.mxu0
    %v286 = vadd.f32 %v211, %v285
    %v287 = vpop.f32.mrf.mxu0
    %v288 = vadd.f32 %v216, %v287
    %289 = vmatmul.bf16.gmra.mxu0 %v266
    %v290 = vpop.f32.mrf.mxu0
    %v291 = vadd.f32 %v221, %v290
    %v292 = vpop.f32.mrf.mxu0
    %v293 = vadd.f32 %v226, %v292
    %294 = vmatmul.bf16.gmra.mxu0 %v269
    %v295 = vpop.f32.mrf.mxu0
    %v296 = vadd.f32 %v231, %v295
    %v297 = vpop.f32.mrf.mxu0
    %v298 = vadd.f32 %v236, %v297
    %299 = vdwg.mxu0
    %vm300 = vcmp.gt.f32.partialorder %v281, 0.0
    %vm301 = vcmp.gt.f32.partialorder %v283, 0.0
    %vm302 = vcmp.gt.f32.partialorder %v286, 0.0
    %vm303 = vcmp.gt.f32.partialorder %v288, 0.0
    %vm304 = vcmp.gt.f32.partialorder %v291, 0.0
    %vm305 = vcmp.gt.f32.partialorder %v293, 0.0
    %vm306 = vcmp.gt.f32.partialorder %v296, 0.0
    %vm307 = vcmp.gt.f32.partialorder %v298, 0.0
    %v308 = vmul.f32 %v281, 0.01
    %v309 = vmul.f32 %v283, 0.01
    %v310 = vmul.f32 %v286, 0.01
    %v311 = vmul.f32 %v288, 0.01
    %v312 = vmul.f32 %v291, 0.01
    %v313 = vmul.f32 %v293, 0.01
    %v314 = vmul.f32 %v296, 0.01
    %v315 = vmul.f32 %v298, 0.01
    %v316 = vsel %vm300, %v281, %v308
    %v317 = vsel %vm301, %v283, %v309
    %v318 = vsel %vm302, %v286, %v310
    %v319 = vsel %vm303, %v288, %v311
    %v320 = vsel %vm304, %v291, %v312
    %v321 = vsel %vm305, %v293, %v313
    %v322 = vsel %vm306, %v296, %v314
    %v323 = vsel %vm307, %v298, %v315
    %v324 = vpack.c.bf16 %v317, %v316
    %v325 = vpack.c.bf16 %v319, %v318
    %v326 = vpack.c.bf16 %v321, %v320
    %v327 = vpack.c.bf16 %v323, %v322
    %v328 = vld [vmem:[%s5] sm:$0xf]
    %v329 = vld [vmem:[%s6] sm:$0xff]
    %331 = vset.pattern.permute.xlu0 0
    %332 = vperm.xlu0 %331, %v329
    %v333 = vpop.permute.xlu0 %332
    %v336 = vsel %vm258, %v328, 0
    %338 = vmatpush.bf16.msra.mxu0 0
    %339 = vmatpush.bf16.msra.mxu0 0
    %340 = vmatpush.bf16.msra.mxu0 0
    %341 = vmatpush.bf16.msra.mxu0 0
    %342 = vmatpush.bf16.msra.mxu0 %v327
    %343 = vmatpush.bf16.msra.mxu0 %v326
    %344 = vmatpush.bf16.msra.mxu0 %v325
    %345 = vmatpush.bf16.msra.mxu0 %v324
    %346 = vmatmul.bf16.gmra.mxu0 %v336
    %v347 = vpop.f32.mrf.mxu0
    %v348 = vadd.f32 %v333, %v347
    %v349 = vpop.f32.mrf.mxu0
    %350 = vdwg.mxu0
    %351 = vst [vmem:[#allocation2] sm:$0xff] %v348
    // Predicated region
    $region30: #{tpu_custom_call.1} parent=1 // pred_check
      _
    $region31: #{tpu_custom_call.1} parent=1 // pred_check_branch
      %353 = sbr.rel (0) target = $region33
    $region32: #{tpu_custom_call.1} parent=1 // pred_region
      %355 = vsyncadd [#allocation3], 0
      %s357 = sshll.u32 [#allocation2], 4
      %s358 = int_to_ptr.vmem [resolvable:$true] %s357
      %s359 = sshll.u32 %s7, 4
      %s360 = int_to_ptr.hbm [resolvable:$true] %s359
      %362 = dma.vmem_to_hbm [thread:$0]  %s358, 128, %s360, [#allocation3]
    $region33: #{tpu_custom_call.1} parent=1 // pred_fallthru
      _
    // Predicated region
    $region34: #{tpu_custom_call.1} parent=1 // pred_check
      _
    $region35: #{tpu_custom_call.1} parent=1 // pred_check_branch
      %364 = sbr.rel (0) target = $region37
    $region36: #{tpu_custom_call.1} parent=1 // pred_region
      %366 = dma.done [#allocation3], 128
    $region37: #{tpu_custom_call.1} parent=1 // pred_fallthru
      _
    %367 = vsyncpa [#allocation3], 1

</llo_original>
